<compile_context>
chip_gen: v7x
topology: tpu7x:2x2x1
jax: 0.10.0
libtpu: 0.0.40
codegen_flags: <defaults>
</compile_context>

<pallas_src>
import functools

import jax
import jax.numpy as jnp
from jax import lax
from jax.experimental import pallas as pl
from jax.experimental.pallas import tpu as pltpu


# --------------------------------------------------------------------------------------
# Kernel
# --------------------------------------------------------------------------------------
def _fpn_level_kernel(t_ref, s_ref, w_ref, b_ref, out_ref, acc_ref, *,
                      hw, lane_tile, matmul_dtype):
    """One grid step: (Ct, lane_tile) teacher pixels + (Cs, lane_tile) student pixels.

    Accumulates per-pixel (1 - cosine_similarity) into a lane-wise f32 VMEM scratch;
    the cross-lane reduce + scalar store happen once per (n, hw_outer) reduction pass.
    """
    ho = pl.program_id(1)                 # spatial outer tile (parallel, for megacore)
    hi = pl.program_id(2)                 # spatial inner tile (reduction axis)
    n_inner = pl.num_programs(2)

    @pl.when(hi == 0)
    def _():
        acc_ref[...] = jnp.zeros_like(acc_ref)

    t = t_ref[0]                          # (Ct, lane_tile), native dtype
    s = s_ref[0]                          # (Cs, lane_tile), native dtype
    w = w_ref[...]                        # (Cs, Ct)

    # Optional reduced-precision matmul: cast per-tile in VMEM (never in the wrapper).
    if matmul_dtype is not None:
        if t.dtype != matmul_dtype:
            t = t.astype(matmul_dtype)
        if w.dtype != matmul_dtype:
            w = w.astype(matmul_dtype)

    # 1x1 conv over channels: (Cs, Ct) @ (Ct, lane_tile) on the MXU, f32 accumulation.
    adapted = jnp.dot(w, t, preferred_element_type=jnp.float32)
    adapted = adapted + b_ref[...]        # (Cs, 1) bias broadcasts over lanes

    s32 = s if s.dtype == jnp.float32 else s.astype(jnp.float32)

    # Channel (sublane) reductions -> per-pixel scalars, shape (1, lane_tile).
    nt2 = jnp.sum(adapted * adapted, axis=0, keepdims=True)   # ||adapted||^2
    ns2 = jnp.sum(s32 * s32, axis=0, keepdims=True)           # ||s||^2
    ts = jnp.sum(adapted * s32, axis=0, keepdims=True)        # <adapted, s>

    # F.normalize(p=2, dim=1, eps=1e-12) on both, then
    # F.cosine_similarity(dim=1, eps=1e-8) == dot / sqrt(max(w1*w2, 1e-16)).
    # Exact algebraic rearrangement on (1, lane_tile) vectors only.
    t_nrm = jnp.maximum(jnp.sqrt(nt2), 1e-12)
    s_nrm = jnp.maximum(jnp.sqrt(ns2), 1e-12)
    inv = 1.0 / (t_nrm * s_nrm)
    dot_n = ts * inv                      # <t_norm, s_norm>
    w12 = (nt2 * ns2) * (inv * inv)       # ||t_norm||^2 * ||s_norm||^2
    cos = dot_n * lax.rsqrt(jnp.maximum(w12, jnp.float32(1e-16)))

    diff = 1.0 - cos                      # (1, lane_tile)
    if hw % lane_tile != 0:
        # Ragged last tile: zero lanes past the true spatial extent.  Garbage in the
        # padded lanes may be NaN/Inf by now; jnp.where drops it (lane-local math).
        g = ho * n_inner + hi
        col = g * lane_tile + lax.broadcasted_iota(jnp.int32, diff.shape, 1)
        diff = jnp.where(col < hw, diff, 0.0)

    acc_ref[...] += diff                  # lane-wise, no XLU / scalar RMW per step

    @pl.when(hi == n_inner - 1)
    def _():
        out_ref[...] = jnp.sum(acc_ref[...], keepdims=True).reshape(1, 1, 1)


# --------------------------------------------------------------------------------------
# Tiling / VMEM sizing
# --------------------------------------------------------------------------------------
def _est_vmem_bytes(t_hw, ct, cs, in_itemsize):
    inputs = 2 * (ct + cs) * t_hw * in_itemsize        # double-buffered activation tiles
    interm = 3 * cs * t_hw * 4                         # adapted / s(f32) / product temps
    weight = 2 * (cs * ct * in_itemsize + cs * 4)      # adapter weight + bias buffers
    acc = t_hw * 4 + (1 << 15)                         # accumulator + slack
    return inputs + interm + weight + acc


def _pick_lane_tile(hw, ct, cs, in_itemsize, lane_tile_max, budget_bytes):
    """Largest lane tile (pixels/step) that fits the VMEM budget.

    Full HW as a single tile when small enough (any size allowed when equal to the
    full dim), otherwise a multiple of 128 with a floor of 512 (tile sweeps show
    512-1024 lanes already captures ~85% of HBM roofline)."""
    if hw <= lane_tile_max and (hw <= 512 or _est_vmem_bytes(hw, ct, cs, in_itemsize) <= budget_bytes):
        return hw
    t = lane_tile_max if hw > lane_tile_max else max(512, (hw // 128) * 128)
    t = (t // 128) * 128
    while t > 512 and _est_vmem_bytes(t, ct, cs, in_itemsize) > budget_bytes:
        t -= 128
    return max(t, 128)


# --------------------------------------------------------------------------------------
# Per-level wrappers
# --------------------------------------------------------------------------------------
def _fpn_level_loss_pallas(t_nchw, s_nchw, w, b, *, lane_tile_max=2048,
                           matmul_dtype=None, vmem_budget_bytes=24 << 20):
    """One FPN level: mean over (N, H, W) of (1 - cos(adapter(t), s)) along channels."""
    assert lane_tile_max % 128 == 0 and lane_tile_max >= 512
    N, Ct, H, W = t_nchw.shape
    Cs = s_nchw.shape[1]
    HW = H * W

    # Free reshapes (H, W trailing contiguous dims).  No dtype cast in the wrapper:
    # activations enter the kernel at their native dtype.
    t3 = t_nchw.reshape(N, Ct, HW)
    s3 = s_nchw.reshape(N, Cs, HW)
    w2 = w.reshape(Cs, Ct)
    b2 = b.reshape(Cs, 1).astype(jnp.float32)

    in_itemsize = max(jnp.dtype(t3.dtype).itemsize, jnp.dtype(s3.dtype).itemsize)
    t_hw = _pick_lane_tile(HW, Ct, Cs, in_itemsize, lane_tile_max, vmem_budget_bytes)
    est = _est_vmem_bytes(t_hw, Ct, Cs, in_itemsize)
    # Explicit scoped-VMEM limit; capped well below v7x's 64 MiB physical VMEM.
    vmem_limit = int(min(max(2 * est, 16 << 20), 40 << 20))

    grid_hw = pl.cdiv(HW, t_hw)
    # v7x megacore: when the batch axis can't feed both TensorCores, split the spatial
    # tiles into (parallel outer) x (arbitrary inner).  No effect on v5e/v6e (one TC).
    hw_outer = 2 if (N < 2 and grid_hw >= 2 and grid_hw % 2 == 0) else 1
    hw_inner = grid_hw // hw_outer

    kernel = functools.partial(_fpn_level_kernel, hw=HW, lane_tile=t_hw,
                               matmul_dtype=matmul_dtype)

    spatial_map = lambda n, ho, hi, _hwi=hw_inner: (n, 0, ho * _hwi + hi)

    partials = pl.pallas_call(
        kernel,
        out_shape=jax.ShapeDtypeStruct((N * hw_outer, 1, 1), jnp.float32),
        grid_spec=pltpu.PrefetchScalarGridSpec(
            num_scalar_prefetch=0,
            grid=(N, hw_outer, hw_inner),
            in_specs=[
                pl.BlockSpec((1, Ct, t_hw), spatial_map),                 # teacher pixels
                pl.BlockSpec((1, Cs, t_hw), spatial_map),                 # student pixels
                pl.BlockSpec((Cs, Ct), lambda n, ho, hi: (0, 0)),         # adapter weight
                pl.BlockSpec((Cs, 1), lambda n, ho, hi: (0, 0)),          # adapter bias
            ],
            out_specs=pl.BlockSpec(
                (1, 1, 1), lambda n, ho, hi, _hwo=hw_outer: (n * _hwo + ho, 0, 0)),
            scratch_shapes=[pltpu.VMEM((1, t_hw), jnp.float32)],          # lane accumulator
        ),
        compiler_params=pltpu.CompilerParams(
            dimension_semantics=("parallel", "parallel", "arbitrary"),
            vmem_limit_bytes=vmem_limit),
    )(t3, s3, w2, b2)

    return jnp.sum(partials) / jnp.float32(N * HW)


def _fpn_level_loss_xla(t, s, w, b):
    """Plain-XLA path for tiny levels (launch overhead > compute); same f32 math."""
    tf = t.astype(jnp.float32)
    sf = s.astype(jnp.float32)
    adapted = jnp.einsum("oc,nchw->nohw", w.astype(jnp.float32), tf) + b.reshape(1, -1, 1, 1)
    nt2 = jnp.sum(adapted * adapted, axis=1)
    ns2 = jnp.sum(sf * sf, axis=1)
    ts = jnp.sum(adapted * sf, axis=1)
    t_nrm = jnp.maximum(jnp.sqrt(nt2), 1e-12)
    s_nrm = jnp.maximum(jnp.sqrt(ns2), 1e-12)
    inv = 1.0 / (t_nrm * s_nrm)
    cos = (ts * inv) * lax.rsqrt(jnp.maximum(nt2 * ns2 * inv * inv, 1e-16))
    return jnp.mean(1.0 - cos)


def fpn_adapter_forward(teacher_features, student_features, params, *,
                        lane_tile_max=2048, matmul_dtype=None,
                        small_level_hw=256, vmem_budget_bytes=24 << 20):
    """Equivalent of FPNAdapter.forward.

    params[i] = (w: (Cs, Ct) -- PyTorch conv weight (out, in) with 1x1 kernel squeezed,
                 b: (Cs,)).
    matmul_dtype=None keeps f32 parity with PyTorch; jnp.bfloat16 casts per-tile in VMEM.
    """
    loss = jnp.float32(0.0)
    for (w, b), t_feat, s_feat in zip(params, teacher_features, student_features):
        hw = t_feat.shape[2] * t_feat.shape[3]
        if hw <= small_level_hw:
            loss = loss + _fpn_level_loss_xla(t_feat, s_feat, w, b)
        else:
            loss = loss + _fpn_level_loss_pallas(
                t_feat, s_feat, w, b, lane_tile_max=lane_tile_max,
                matmul_dtype=matmul_dtype, vmem_budget_bytes=vmem_budget_bytes)
    return loss


# --------------------------------------------------------------------------------------
# Reference + demo
# --------------------------------------------------------------------------------------
def _reference_loss(teacher_features, student_features, params):
    """Pure-JAX f32 reference of the PyTorch forward (NCHW, normalize-then-cosine)."""
    loss = jnp.float32(0.0)
    for (w, b), t, s in zip(params, teacher_features, student_features):
        tf = t.astype(jnp.float32)
        sf = s.astype(jnp.float32)
        adapted = jnp.einsum("oc,nchw->nohw", w.astype(jnp.float32), tf) + b.reshape(1, -1, 1, 1)
        tn = adapted / jnp.maximum(
            jnp.sqrt(jnp.sum(adapted * adapted, axis=1, keepdims=True)), 1e-12)
        sn = sf / jnp.maximum(
            jnp.sqrt(jnp.sum(sf * sf, axis=1, keepdims=True)), 1e-12)
        dot = jnp.sum(tn * sn, axis=1)
        w1 = jnp.sum(tn * tn, axis=1)
        w2 = jnp.sum(sn * sn, axis=1)
        cos = dot / jnp.sqrt(jnp.maximum(w1 * w2, 1e-16))
        loss = loss + jnp.mean(1.0 - cos)
    return loss


def _init_params(key, teacher_channels, student_channels):
    """Deterministic Conv2d(1x1) params (PyTorch-style uniform(-k, k), k=1/sqrt(fan_in))."""
    params = []
    for t_ch, s_ch in zip(teacher_channels, student_channels):
        key, kw, kb = jax.random.split(key, 3)
        k = 1.0 / jnp.sqrt(jnp.float32(t_ch))
        w = jax.random.uniform(kw, (s_ch, t_ch), jnp.float32, -k, k)   # (out, in)
        b = jax.random.uniform(kb, (s_ch,), jnp.float32, -k, k)
        params.append((w, b))
    return params


if __name__ == "__main__":
    # Small FPN-like pyramid: 5 levels, batch=2, teacher 48ch -> student 32ch.
    # Level sizes chosen to exercise every kernel path at lane_tile_max=512:
    #   24x24=576  -> 2 spatial tiles + ragged-mask path,
    #   16x16=256  -> single full-HW tile (multiple of 128),
    #   12x12=144  -> single full-HW tile (NOT a multiple of 128),
    #   8x8 / 4x4  -> tiny-level plain-XLA path (small_level_hw=100).
    teacher_channels = [48, 48, 48, 48, 48]
    student_channels = [32, 32, 32, 32, 32]
    spatial = [24, 16, 12, 8, 4]
    N = 2

    key = jax.random.PRNGKey(0)
    params = _init_params(key, teacher_channels, student_channels)

    teacher_features = []
    student_features = []
    for t_ch, s_ch, hw in zip(teacher_channels, student_channels, spatial):
        key, kt, ks = jax.random.split(key, 3)
        teacher_features.append(jax.random.normal(kt, (N, t_ch, hw, hw), jnp.float32))
        student_features.append(jax.random.normal(ks, (N, s_ch, hw, hw), jnp.float32))

    loss = fpn_adapter_forward(teacher_features, student_features, params,
                               lane_tile_max=512, small_level_hw=100)
    loss = jax.block_until_ready(loss)

    ref = jax.block_until_ready(
        _reference_loss(teacher_features, student_features, params))
    assert jnp.allclose(loss, ref, rtol=1e-3, atol=1e-3), (loss, ref)

    print("KERNEL_OK")
</pallas_src>

<mosaic_0001>
module attributes {stable_mosaic.version = 11 : i64} {
  func.func @_fpn_level_kernel(%arg0: i32, %arg1: i32, %arg2: i32, %arg3: memref<1x48x512xf32, #tpu.memory_space<vmem>>, %arg4: memref<1x32x512xf32, #tpu.memory_space<vmem>>, %arg5: memref<32x48xf32, #tpu.memory_space<vmem>>, %arg6: memref<32x1xf32, #tpu.memory_space<vmem>>, %arg7: memref<1x1x1xf32, #tpu.memory_space<vmem>>, %arg8: memref<1x512xf32, #tpu.memory_space<vmem>>) attributes {dimension_semantics = [#tpu.dimension_semantics<parallel>, #tpu.dimension_semantics<parallel>, #tpu.dimension_semantics<arbitrary>], iteration_bounds = array<i64: 2, 1, 2>, scalar_prefetch = 0 : i64, scratch_operands = 1 : i64, tpu.core_type = #tpu.core_type<tc>, window_params = [{transform_indices = @transform_0, window_bounds = array<i64: 1, 48, 512>}, {transform_indices = @transform_1, window_bounds = array<i64: 1, 32, 512>}, {pipeline_mode = #tpu.pipeline_mode<synchronous>, transform_indices = @transform_2, window_bounds = array<i64: 32, 48>}, {pipeline_mode = #tpu.pipeline_mode<synchronous>, transform_indices = @transform_3, window_bounds = array<i64: 32, 1>}, {transform_indices = @transform_4, window_bounds = array<i64: 1, 1, 1>}]} {
    %c0_i32 = arith.constant 0 : i32
    %0 = arith.cmpi eq, %arg2, %c0_i32 : i32
    %1 = arith.extui %0 : i1 to i32
    %c0_i32_0 = arith.constant 0 : i32
    %2 = arith.cmpi ne, %1, %c0_i32_0 : i32
    scf.if %2 {
      %cst_24 = arith.constant 0.000000e+00 : f32
      %56 = vector.broadcast %cst_24 : f32 to vector<1x512xf32>
      %c0_25 = arith.constant 0 : index
      %c0_26 = arith.constant 0 : index
      %57 = vector.load %arg8[%c0_25, %c0_26] : memref<1x512xf32, #tpu.memory_space<vmem>>, vector<1x512xf32>
      tpu.vector_store %arg8[%c0_25, %c0_26], %56 {strides = array<i32>} : memref<1x512xf32, #tpu.memory_space<vmem>>, vector<1x512xf32>,
    } else {
    }
    %c0 = arith.constant 0 : index
    %c0_1 = arith.constant 0 : index
    %c0_2 = arith.constant 0 : index
    %3 = vector.load %arg3[%c0, %c0_1, %c0_2] : memref<1x48x512xf32, #tpu.memory_space<vmem>>, vector<1x48x512xf32>
    %4 = vector.shape_cast %3 : vector<1x48x512xf32> to vector<48x512xf32>
    %c0_3 = arith.constant 0 : index
    %c0_4 = arith.constant 0 : index
    %c0_5 = arith.constant 0 : index
    %5 = vector.load %arg4[%c0_3, %c0_4, %c0_5] : memref<1x32x512xf32, #tpu.memory_space<vmem>>, vector<1x32x512xf32>
    %6 = vector.shape_cast %5 : vector<1x32x512xf32> to vector<32x512xf32>
    %c0_6 = arith.constant 0 : index
    %c0_7 = arith.constant 0 : index
    %7 = vector.load %arg5[%c0_6, %c0_7] : memref<32x48xf32, #tpu.memory_space<vmem>>, vector<32x48xf32>
    %cst = arith.constant dense<0.000000e+00> : vector<32x512xf32>
    %8 = tpu.matmul %7, %4, %cst {dimension_numbers = #tpu.dot_dimension_numbers<[1], [0], [0], [1], [0, 0, 1, 1], [], []>} : vector<32x48xf32>, vector<48x512xf32>, vector<32x512xf32> -> vector<32x512xf32>
    %c0_8 = arith.constant 0 : index
    %c0_9 = arith.constant 0 : index
    %9 = vector.load %arg6[%c0_8, %c0_9] : memref<32x1xf32, #tpu.memory_space<vmem>>, vector<32x1xf32>
    %10 = vector.broadcast %9 : vector<32x1xf32> to vector<32x512xf32>
    %11 = arith.addf %8, %10 : vector<32x512xf32>
    %12 = arith.mulf %11, %11 : vector<32x512xf32>
    %cst_10 = arith.constant dense<0.000000e+00> : vector<512xf32>
    %13 = vector.multi_reduction <add>, %12, %cst_10 [0] : vector<32x512xf32> to vector<512xf32>
    %14 = vector.shape_cast %13 : vector<512xf32> to vector<1x512xf32>
    %15 = arith.mulf %6, %6 : vector<32x512xf32>
    %cst_11 = arith.constant dense<0.000000e+00> : vector<512xf32>
    %16 = vector.multi_reduction <add>, %15, %cst_11 [0] : vector<32x512xf32> to vector<512xf32>
    %17 = vector.shape_cast %16 : vector<512xf32> to vector<1x512xf32>
    %18 = arith.mulf %11, %6 : vector<32x512xf32>
    %cst_12 = arith.constant dense<0.000000e+00> : vector<512xf32>
    %19 = vector.multi_reduction <add>, %18, %cst_12 [0] : vector<32x512xf32> to vector<512xf32>
    %20 = vector.shape_cast %19 : vector<512xf32> to vector<1x512xf32>
    %21 = math.sqrt %14 : vector<1x512xf32>
    %cst_13 = arith.constant 9.99999996E-13 : f32
    %22 = vector.broadcast %cst_13 : f32 to vector<1x512xf32>
    %23 = arith.maximumf %21, %22 : vector<1x512xf32>
    %24 = math.sqrt %17 : vector<1x512xf32>
    %cst_14 = arith.constant 9.99999996E-13 : f32
    %25 = vector.broadcast %cst_14 : f32 to vector<1x512xf32>
    %26 = arith.maximumf %24, %25 : vector<1x512xf32>
    %27 = arith.mulf %23, %26 : vector<1x512xf32>
    %cst_15 = arith.constant 1.000000e+00 : f32
    %28 = vector.broadcast %cst_15 : f32 to vector<1x512xf32>
    %29 = arith.divf %28, %27 : vector<1x512xf32>
    %30 = arith.mulf %20, %29 : vector<1x512xf32>
    %31 = arith.mulf %14, %17 : vector<1x512xf32>
    %32 = arith.mulf %29, %29 : vector<1x512xf32>
    %33 = arith.mulf %31, %32 : vector<1x512xf32>
    %cst_16 = arith.constant 1.000000e-16 : f32
    %34 = vector.broadcast %cst_16 : f32 to vector<1x512xf32>
    %35 = arith.maximumf %33, %34 : vector<1x512xf32>
    %36 = math.rsqrt %35 : vector<1x512xf32>
    %37 = arith.mulf %30, %36 : vector<1x512xf32>
    %cst_17 = arith.constant 1.000000e+00 : f32
    %38 = vector.broadcast %cst_17 : f32 to vector<1x512xf32>
    %39 = arith.subf %38, %37 : vector<1x512xf32>
    %c2_i32 = arith.constant 2 : i32
    %40 = arith.muli %arg1, %c2_i32 : i32
    %41 = arith.addi %40, %arg2 : i32
    %c512_i32 = arith.constant 512 : i32
    %42 = arith.muli %41, %c512_i32 : i32
    %43 = tpu.iota {dimensions = array<i32: 1>} : vector<1x512xi32>
    %44 = vector.broadcast %42 : i32 to vector<1x512xi32>
    %45 = arith.addi %44, %43 : vector<1x512xi32>
    %c576_i32 = arith.constant 576 : i32
    %46 = vector.broadcast %c576_i32 : i32 to vector<1x512xi32>
    %47 = arith.cmpi slt, %45, %46 : vector<1x512xi32>
    %cst_18 = arith.constant 0.000000e+00 : f32
    %48 = vector.broadcast %cst_18 : f32 to vector<1x512xf32>
    %49 = arith.select %47, %39, %48 : vector<1x512xi1>, vector<1x512xf32>
    %c0_19 = arith.constant 0 : index
    %c0_20 = arith.constant 0 : index
    %50 = vector.load %arg8[%c0_19, %c0_20] : memref<1x512xf32, #tpu.memory_space<vmem>>, vector<1x512xf32>
    %51 = arith.addf %50, %49 : vector<1x512xf32>
    %c0_21 = arith.constant 0 : index
    %c0_22 = arith.constant 0 : index
    %52 = vector.load %arg8[%c0_21, %c0_22] : memref<1x512xf32, #tpu.memory_space<vmem>>, vector<1x512xf32>
    tpu.vector_store %arg8[%c0_21, %c0_22], %51 {strides = array<i32>} : memref<1x512xf32, #tpu.memory_space<vmem>>, vector<1x512xf32>,
    %c1_i32 = arith.constant 1 : i32
    %53 = arith.cmpi eq, %arg2, %c1_i32 : i32
    %54 = arith.extui %53 : i1 to i32
    %c0_i32_23 = arith.constant 0 : i32
    %55 = arith.cmpi ne, %54, %c0_i32_23 : i32
    scf.if %55 {
      %c0_24 = arith.constant 0 : index
      %c0_25 = arith.constant 0 : index
      %56 = vector.load %arg8[%c0_24, %c0_25] : memref<1x512xf32, #tpu.memory_space<vmem>>, vector<1x512xf32>
      %57 = vector.shape_cast %56 : vector<1x512xf32> to vector<1x1x512xf32>
      %cst_26 = arith.constant dense<0.000000e+00> : vector<1xf32>
      %58 = vector.multi_reduction <add>, %57, %cst_26 [1, 2] : vector<1x1x512xf32> to vector<1xf32>
      %59 = vector.shape_cast %58 : vector<1xf32> to vector<1x1x1xf32>
      %60 = vector.extract %59[0, 0, 0] : f32 from vector<1x1x1xf32>
      %61 = vector.broadcast %60 : f32 to vector<1x1xf32>
      %62 = vector.shape_cast %61 : vector<1x1xf32> to vector<1x1x1xf32>
      %c0_27 = arith.constant 0 : index
      %c0_28 = arith.constant 0 : index
      %c0_29 = arith.constant 0 : index
      %63 = vector.load %arg7[%c0_27, %c0_28, %c0_29] : memref<1x1x1xf32, #tpu.memory_space<vmem>>, vector<1x1x1xf32>
      tpu.vector_store %arg7[%c0_27, %c0_28, %c0_29], %62 {strides = array<i32>} : memref<1x1x1xf32, #tpu.memory_space<vmem>>, vector<1x1x1xf32>,
    } else {
    }
    return
  }
  func.func @transform_0(%arg0: i32, %arg1: i32, %arg2: i32) -> (i32, i32, i32) {
    %c2_i32 = arith.constant 2 : i32
    %0 = arith.muli %arg1, %c2_i32 : i32
    %1 = arith.addi %0, %arg2 : i32
    %c0_i32 = arith.constant 0 : i32
    %c0_i32_0 = arith.constant 0 : i32
    return %arg0, %c0_i32, %1 : i32, i32, i32
  }
  func.func @transform_1(%arg0: i32, %arg1: i32, %arg2: i32) -> (i32, i32, i32) {
    %c2_i32 = arith.constant 2 : i32
    %0 = arith.muli %arg1, %c2_i32 : i32
    %1 = arith.addi %0, %arg2 : i32
    %c0_i32 = arith.constant 0 : i32
    %c0_i32_0 = arith.constant 0 : i32
    return %arg0, %c0_i32, %1 : i32, i32, i32
  }
  func.func @transform_2(%arg0: i32, %arg1: i32, %arg2: i32) -> (i32, i32) {
    %c0_i32 = arith.constant 0 : i32
    %c0_i32_0 = arith.constant 0 : i32
    %c0_i32_1 = arith.constant 0 : i32
    return %c0_i32, %c0_i32_0 : i32, i32
  }
  func.func @transform_3(%arg0: i32, %arg1: i32, %arg2: i32) -> (i32, i32) {
    %c0_i32 = arith.constant 0 : i32
    %c0_i32_0 = arith.constant 0 : i32
    %c0_i32_1 = arith.constant 0 : i32
    return %c0_i32, %c0_i32_0 : i32, i32
  }
  func.func @transform_4(%arg0: i32, %arg1: i32, %arg2: i32) -> (i32, i32, i32) {
    %c1_i32 = arith.constant 1 : i32
    %0 = arith.muli %arg0, %c1_i32 : i32
    %1 = arith.addi %0, %arg1 : i32
    %c0_i32 = arith.constant 0 : i32
    %c0_i32_0 = arith.constant 0 : i32
    %c0_i32_1 = arith.constant 0 : i32
    return %1, %c0_i32, %c0_i32_0 : i32, i32, i32
  }
}

</mosaic_0001>

<llo_original>
// kernel: tpu_custom_call.1
$region0: #{tpu_custom_call.1}
  #allocation0 [shape = 'u32[]', space=smem, size = 0x4, offset = 0x4, fixed_abs, tag = 'smem constant byte address 0x4 - core index']
  #allocation1 [shape = 'u32[144,128]{1,0:T(1,128)}', space=vmem, size = 0x12000, scoped, tag = 'internal scratch']
  #allocation2 [shape = 'f32[1,512]{1,0:T(1,128)}', space=vmem, size = 0x800, scoped, tag = 'scratch operand']
  %s0 = inlined_call_operand.hbm [shape: f32[2,48,576], index: 0, kind: input, shape index: {}]
  %s1 = inlined_call_operand.hbm [shape: f32[2,32,576], index: 1, kind: input, shape index: {}]
  %s2 = inlined_call_operand.vmem [shape: f32[32,48], index: 2, kind: input, shape index: {}]
  %s3 = inlined_call_operand.vmem [shape: f32[32,1], index: 3, kind: input, shape index: {}]
  %s4 = inlined_call_operand.vmem [shape: f32[2,1,1], index: 4, kind: output, shape index: {}]
  %s5 = sld [smem:[#allocation0]]
  $region65: #{tpu_custom_call.1} parent=0
    _
  %s7 = ssub.s32 1, %s5
  %s8 = scalar_select 0, %s7, %s5
  $region1: #{tpu_custom_call.1} parent=0
    #allocation3 [shape = 'u8[196608]{0}', space=vmem, size = 0x30000, scoped, tag = 'input window, operand 0']
    #allocation4 [shape = 's32[2]{0}', space=sflag, size = 0x8, scoped, tag = 'scoped memory for tpu_custom_call.1']
    #allocation5 [shape = 'u8[131072]{0}', space=vmem, size = 0x20000, scoped, tag = 'input window, operand 1']
    #allocation6 [shape = 's32[2]{0}', space=sflag, size = 0x8, scoped, tag = 'scoped memory for tpu_custom_call.1']
    %9 = vsyncpa [#allocation4], 0
    %s10 = scalar_lea.sflag [#allocation4], 1
    %11 = vsyncpa %s10, 0
    %12 = vsyncpa [#allocation6], 0
    %s13 = scalar_lea.sflag [#allocation6], 1
    %14 = vsyncpa %s13, 0
    loop: start=0, step=1, limit=6
    $region2: #{tpu_custom_call.1} parent=1 // loop_pre_header
      _
    $region3: #{tpu_custom_call.1} parent=1 // loop_header
      %s16 = sphi 0, %s20
      %p17 = scmp.ge.s32.totalorder %s16, 6
      %s23 = sphi 0, %s42
      %s24 = sphi 0, %s38
      %s25 = sphi 0, %s34
      %s26 = sphi 0, %s23
      %s27 = sphi 0, %s24
      %s28 = sphi 0, %s25
      %s29 = sphi 0, %s26
      %s30 = sphi 0, %s27
      %s31 = sphi 0, %s28
      %s51 = sphi 0, %s53
      %s54 = sphi 0, %s51
      %s55 = sphi 0, %s54
      %s71 = sphi 0, %s55
      %s83 = sphi 0, %s85
      %s86 = sphi 0, %s83
      %s87 = sphi 0, %s86
      %s103 = sphi 0, %s87
      %s107 = sphi 0, %s107
      %s109 = sphi 0, %s107
      %s110 = sphi 0, %s109
      %s124 = sphi 0, %s110
      %s128 = sphi 0, %s128
      %s130 = sphi 0, %s128
      %s131 = sphi 0, %s130
      %s145 = sphi 0, %s131
      %s153 = sphi 0, %s155
      %s156 = sphi 0, %s153
      %s157 = sphi 0, %s156
      %s173 = sphi 0, %s157
    $region4: #{tpu_custom_call.1} parent=1 // loop_header_branch
      %19 = sbr.rel (%p17) target = $region8
    $region5: #{tpu_custom_call.1} parent=1 // loop_body
      %s21 = ssub.s32 %s16, 1
      %s22 = ssub.s32 %s16, 2
      %s32 = sadd.s32 1, %s25
      %p33 = scmp.ge.s32.totalorder %s32, 2
      %s34 = scalar_select %p33, 0, %s32
      %s35 = sadd.s32 1, %s24
      %s36 = scalar_select %p33, %s35, %s24
      %p37 = scmp.ge.s32.totalorder %s36, 1
      %s38 = scalar_select %p37, 0, %s36
      %s39 = sadd.s32 1, %s23
      %s40 = scalar_select %p37, %s39, %s23
      %p41 = scmp.ge.s32.totalorder %s40, 2
      %s42 = scalar_select %p41, 0, %s40
      %s43 = smul.u32 %s24, 2
      %s44 = sadd.s32 %s43, %s25
      %s45 = smul.u32 %s38, 2
      %s46 = sadd.s32 %s45, %s34
      %s47 = ssub.s32 %s23, %s42
      %s48 = ssub.s32 %s44, %s46
      %s49 = sor.u32 %s47, %s48
      %p50 = scmp.eq.s32.totalorder %s49, 0
      %s52 = sadd.s32 %s51, 1
      %s53 = scalar_select %p50, %s51, %s52
      %p56 = pneg %p50
      %p57 = scmp.eq.s32.totalorder %s16, 3
      %p58 = por %p56, %p57
      %p59 = scmp.ne.s32.totalorder %s51, %s54
      %p60 = scmp.eq.s32.totalorder %s16, 0
      %p61 = por %p59, %p60
      %p62 = scmp.ne.s32.totalorder %s51, %s54
      %p63 = scmp.eq.s32.totalorder %s21, 3
      %p64 = por %p62, %p63
      %p65 = scmp.ne.s32.totalorder %s54, %s55
      %p66 = scmp.eq.s32.totalorder %s21, 0
      %p67 = por %p65, %p66
      %p68 = scmp.ne.s32.totalorder %s54, %s55
      %p69 = scmp.eq.s32.totalorder %s22, 3
      %p70 = por %p68, %p69
      %p72 = scmp.ne.s32.totalorder %s55, %s71
      %p73 = scmp.eq.s32.totalorder %s22, 0
      %p74 = por %p72, %p73
      %s75 = smul.u32 %s24, 2
      %s76 = sadd.s32 %s75, %s25
      %s77 = smul.u32 %s38, 2
      %s78 = sadd.s32 %s77, %s34
      %s79 = ssub.s32 %s23, %s42
      %s80 = ssub.s32 %s76, %s78
      %s81 = sor.u32 %s79, %s80
      %p82 = scmp.eq.s32.totalorder %s81, 0
      %s84 = sadd.s32 %s83, 1
      %s85 = scalar_select %p82, %s83, %s84
      %p88 = pneg %p82
      %p89 = scmp.eq.s32.totalorder %s16, 3
      %p90 = por %p88, %p89
      %p91 = scmp.ne.s32.totalorder %s83, %s86
      %p92 = scmp.eq.s32.totalorder %s16, 0
      %p93 = por %p91, %p92
      %p94 = scmp.ne.s32.totalorder %s83, %s86
      %p95 = scmp.eq.s32.totalorder %s21, 3
      %p96 = por %p94, %p95
      %p97 = scmp.ne.s32.totalorder %s86, %s87
      %p98 = scmp.eq.s32.totalorder %s21, 0
      %p99 = por %p97, %p98
      %p100 = scmp.ne.s32.totalorder %s86, %s87
      %p101 = scmp.eq.s32.totalorder %s22, 3
      %p102 = por %p100, %p101
      %p104 = scmp.ne.s32.totalorder %s87, %s103
      %p105 = scmp.eq.s32.totalorder %s22, 0
      %p106 = por %p104, %p105
      %s108 = sadd.s32 %s107, 1
      %p111 = scmp.eq.s32.totalorder %s16, 3
      %p112 = scmp.ne.s32.totalorder %s107, %s109
      %p113 = scmp.eq.s32.totalorder %s16, 0
      %p114 = por %p112, %p113
      %p115 = scmp.ne.s32.totalorder %s107, %s109
      %p116 = scmp.eq.s32.totalorder %s21, 3
      %p117 = por %p115, %p116
      %p118 = scmp.ne.s32.totalorder %s109, %s110
      %p119 = scmp.eq.s32.totalorder %s21, 0
      %p120 = por %p118, %p119
      %p121 = scmp.ne.s32.totalorder %s109, %s110
      %p122 = scmp.eq.s32.totalorder %s22, 3
      %p123 = por %p121, %p122
      %p125 = scmp.ne.s32.totalorder %s110, %s124
      %p126 = scmp.eq.s32.totalorder %s22, 0
      %p127 = por %p125, %p126
      %s129 = sadd.s32 %s128, 1
      %p132 = scmp.eq.s32.totalorder %s16, 3
      %p133 = scmp.ne.s32.totalorder %s128, %s130
      %p134 = scmp.eq.s32.totalorder %s16, 0
      %p135 = por %p133, %p134
      %p136 = scmp.ne.s32.totalorder %s128, %s130
      %p137 = scmp.eq.s32.totalorder %s21, 3
      %p138 = por %p136, %p137
      %p139 = scmp.ne.s32.totalorder %s130, %s131
      %p140 = scmp.eq.s32.totalorder %s21, 0
      %p141 = por %p139, %p140
      %p142 = scmp.ne.s32.totalorder %s130, %s131
      %p143 = scmp.eq.s32.totalorder %s22, 3
      %p144 = por %p142, %p143
      %p146 = scmp.ne.s32.totalorder %s131, %s145
      %p147 = scmp.eq.s32.totalorder %s22, 0
      %p148 = por %p146, %p147
      %s149 = sadd.s32 %s23, %s24
      %s150 = sadd.s32 %s42, %s38
      %s151 = ssub.s32 %s149, %s150
      %p152 = scmp.eq.s32.totalorder %s151, 0
      %s154 = sadd.s32 %s153, 1
      %s155 = scalar_select %p152, %s153, %s154
      %p158 = pneg %p152
      %p159 = scmp.eq.s32.totalorder %s16, 3
      %p160 = por %p158, %p159
      %p161 = scmp.ne.s32.totalorder %s153, %s156
      %p162 = scmp.eq.s32.totalorder %s16, 0
      %p163 = por %p161, %p162
      %p164 = scmp.ne.s32.totalorder %s153, %s156
      %p165 = scmp.eq.s32.totalorder %s21, 3
      %p166 = por %p164, %p165
      %p167 = scmp.ne.s32.totalorder %s156, %s157
      %p168 = scmp.eq.s32.totalorder %s21, 0
      %p169 = por %p167, %p168
      %p170 = scmp.ne.s32.totalorder %s156, %s157
      %p171 = scmp.eq.s32.totalorder %s22, 3
      %p172 = por %p170, %p171
      %p174 = scmp.ne.s32.totalorder %s157, %s173
      %p175 = scmp.eq.s32.totalorder %s22, 0
      %p176 = por %p174, %p175
      %p177 = scmp.le.s32.totalorder 1, %s16
      %p178 = scmp.lt.s32.totalorder %s16, 5
      %p179 = pnand %p177, %p178
      %p180 = pneg %p179
      // Predicated region
      $region9: #{tpu_custom_call.1} parent=5 // pred_check
        _
      $region10: #{tpu_custom_call.1} parent=5 // pred_check_branch
        %182 = sbr.rel (%p179) target = $region12
      $region11: #{tpu_custom_call.1} parent=5 // pred_region
        %s183 = ssub.s32 %s16, 1
        // Predicated region
        $region13: #{tpu_custom_call.1} parent=11 // pred_check
          %p184 = pneg %p120
        $region14: #{tpu_custom_call.1} parent=11 // pred_check_branch
          %186 = sbr.rel (%p184) target = $region16
        $region15: #{tpu_custom_call.1} parent=11 // pred_region
          _
        $region16: #{tpu_custom_call.1} parent=11 // pred_fallthru
          _
        // Predicated region
        $region17: #{tpu_custom_call.1} parent=11 // pred_check
          %p187 = pneg %p141
        $region18: #{tpu_custom_call.1} parent=11 // pred_check_branch
          %189 = sbr.rel (%p187) target = $region20
        $region19: #{tpu_custom_call.1} parent=11 // pred_region
          _
        $region20: #{tpu_custom_call.1} parent=11 // pred_fallthru
          _
      $region12: #{tpu_custom_call.1} parent=5 // pred_fallthru
        _
      %p190 = scmp.lt.s32.totalorder %s16, 4
      // Predicated region
      $region21: #{tpu_custom_call.1} parent=5 // pred_check
        %p191 = pneg %p190
      $region22: #{tpu_custom_call.1} parent=5 // pred_check_branch
        %193 = sbr.rel (%p191) target = $region24
      $region23: #{tpu_custom_call.1} parent=5 // pred_region
        // Predicated region
        $region25: #{tpu_custom_call.1} parent=23 // pred_check
          %p194 = pneg %p61
        $region26: #{tpu_custom_call.1} parent=23 // pred_check_branch
          %196 = sbr.rel (%p194) target = $region28
        $region27: #{tpu_custom_call.1} parent=23 // pred_region
          %s197 = sand.u32 %s51, 1
          %s198 = scalar_lea.sflag [#allocation4], %s197
          %s199 = sand.u32 %s51, 1
          %s200 = smul.addr %s199, 192
          %s201 = scalar_lea.vmem [#allocation3], %s200
          %s202 = smul.u32 %s24, 2
          %s203 = sadd.s32 %s202, %s25
          %s204 = smul.u32 4, %s203
          %s205 = ssub.s32 5, %s204
          %p206 = scmp.lt.s32.totalorder %s205, 4
          %s207 = scalar_select %p206, %s205, 4
          %s208 = smul.u32 768, %s207
          %s210 = ssub.s32 3072, %s208
          %211 = vsyncadd %s198, %s210
          %p212 = scmp.ne.s32.totalorder 0, %s208
          %s213 = smul.addr %s23, 30
          %s214 = sadd.s32 %s204, %s213
          %s215 = smul.addr %s214, 128
          %s216 = scalar_lea.hbm %s0, %s215
          %s217 = smul.u32 %s207, 8
          %s218 = smul.u32 %s217, 6
          %s219 = sshll.u32 %s201, 4
          %s220 = int_to_ptr.vmem [resolvable:$true] %s219
          %s221 = sshll.u32 %s218, 4
          %225 = dma.hbm_to_vmem [thread:$0]  (%p212), %s216, %s221, %s220, %s198, 640, 512, %s217
        $region28: #{tpu_custom_call.1} parent=23 // pred_fallthru
          _
        // Predicated region
        $region29: #{tpu_custom_call.1} parent=23 // pred_check
          %p226 = pneg %p93
        $region30: #{tpu_custom_call.1} parent=23 // pred_check_branch
          %228 = sbr.rel (%p226) target = $region32
        $region31: #{tpu_custom_call.1} parent=23 // pred_region
          %s229 = sand.u32 %s83, 1
          %s230 = scalar_lea.sflag [#allocation6], %s229
          %s231 = sand.u32 %s83, 1
          %s232 = smul.addr %s231, 128
          %s233 = scalar_lea.vmem [#allocation5], %s232
          %s234 = smul.u32 %s24, 2
          %s235 = sadd.s32 %s234, %s25
          %s236 = smul.u32 4, %s235
          %s237 = ssub.s32 5, %s236
          %p238 = scmp.lt.s32.totalorder %s237, 4
          %s239 = scalar_select %p238, %s237, 4
          %s240 = smul.u32 512, %s239
          %s242 = ssub.s32 2048, %s240
          %243 = vsyncadd %s230, %s242
          %p244 = scmp.ne.s32.totalorder 0, %s240
          %s245 = smul.addr %s23, 20
          %s246 = sadd.s32 %s236, %s245
          %s247 = smul.addr %s246, 128
          %s248 = scalar_lea.hbm %s1, %s247
          %s249 = smul.u32 %s239, 8
          %s250 = smul.u32 %s249, 4
          %s251 = sshll.u32 %s233, 4
          %s252 = int_to_ptr.vmem [resolvable:$true] %s251
          %s253 = sshll.u32 %s250, 4
          %257 = dma.hbm_to_vmem [thread:$0]  (%p244), %s248, %s253, %s252, %s230, 640, 512, %s249
        $region32: #{tpu_custom_call.1} parent=23 // pred_fallthru
          _
      $region24: #{tpu_custom_call.1} parent=5 // pred_fallthru
        _
      %p258 = scmp.le.s32.totalorder 1, %s16
      %p259 = scmp.lt.s32.totalorder %s16, 5
      %p260 = pnand %p258, %p259
      %p261 = pneg %p260
      // Predicated region
      $region33: #{tpu_custom_call.1} parent=5 // pred_check
        _
      $region34: #{tpu_custom_call.1} parent=5 // pred_check_branch
        %263 = sbr.rel (%p260) target = $region36
      $region35: #{tpu_custom_call.1} parent=5 // pred_region
        %s264 = ssub.s32 %s16, 1
        %s265 = sand.u32 %s54, 1
        %s266 = scalar_lea.sflag [#allocation4], %s265
        %s267 = sand.u32 %s54, 1
        %s268 = smul.addr %s267, 192
        %s269 = scalar_lea.vmem [#allocation3], %s268
        // Predicated region
        $region37: #{tpu_custom_call.1} parent=35 // pred_check
          %p270 = pneg %p67
        $region38: #{tpu_custom_call.1} parent=35 // pred_check_branch
          %272 = sbr.rel (%p270) target = $region40
        $region39: #{tpu_custom_call.1} parent=35 // pred_region
          %273 = dma.done %s266, 3072
        $region40: #{tpu_custom_call.1} parent=35 // pred_fallthru
          _
        %s274 = sand.u32 %s86, 1
        %s275 = scalar_lea.sflag [#allocation6], %s274
        %s276 = sand.u32 %s86, 1
        %s277 = smul.addr %s276, 128
        %s278 = scalar_lea.vmem [#allocation5], %s277
        // Predicated region
        $region41: #{tpu_custom_call.1} parent=35 // pred_check
          %p279 = pneg %p99
        $region42: #{tpu_custom_call.1} parent=35 // pred_check_branch
          %281 = sbr.rel (%p279) target = $region44
        $region43: #{tpu_custom_call.1} parent=35 // pred_region
          %282 = dma.done %s275, 2048
        $region44: #{tpu_custom_call.1} parent=35 // pred_fallthru
          _
        %s283 = sand.u32 %s54, 1
        %s284 = scalar_lea.sflag [#allocation4], %s283
        %s285 = sand.u32 %s54, 1
        %s286 = smul.addr %s285, 192
        %s287 = scalar_lea.vmem [#allocation3], %s286
        %p288 = pneg %p67
        %p289 = pneg %p64
        %s290 = sand.u32 %s86, 1
        %s291 = scalar_lea.sflag [#allocation6], %s290
        %s292 = sand.u32 %s86, 1
        %s293 = smul.addr %s292, 128
        %s294 = scalar_lea.vmem [#allocation5], %s293
        %p295 = pneg %p99
        %p296 = pneg %p96
        %p297 = pneg %p120
        %p298 = pneg %p117
        %p299 = pneg %p141
        %p300 = pneg %p138
        %p301 = pneg %p169
        %p302 = pneg %p166
        %s303 = sadd.s32 %s26, %s27
        %p304 = scmp.lt.s32.totalorder %s303, 1
        %s305 = scalar_select %p304, %s303, 1
        %s306 = scalar_lea.vmem %s4, %s305
        %s307 = smul.u32 %s27, 2
        %s308 = sadd.s32 %s307, %s28
        %s309 = smul.u32 4, %s308
        %s310 = ssub.s32 5, %s309
        %p311 = scmp.lt.s32.totalorder %s310, 4
        %s312 = scalar_select %p311, %s310, 4
        %s313 = smul.u32 768, %s312
        %s314 = smul.u32 %s27, 2
        %s315 = sadd.s32 %s314, %s28
        %s316 = smul.u32 4, %s315
        %s317 = ssub.s32 5, %s316
        %p318 = scmp.lt.s32.totalorder %s317, 4
        %s319 = scalar_select %p318, %s317, 4
        %s320 = smul.u32 512, %s319
        %s321 = sadd.s32 %s26, %s27
        %p322 = scmp.lt.s32.totalorder %s321, 1
        %s323 = scalar_select %p322, %s321, 1
        %s324 = scalar_lea.vmem %s4, %s323
        %s325 = sadd.s32 %s26, %s27
        %p326 = scmp.eq.s32.totalorder %s28, 0
        // Predicated region
        $region45: #{tpu_custom_call.1} parent=35 // pred_check
          %p327 = pneg %p326
        $region46: #{tpu_custom_call.1} parent=35 // pred_check_branch
          %329 = sbr.rel (%p327) target = $region48
        $region47: #{tpu_custom_call.1} parent=35 // pred_region
          %v330 = vlaneseq
          %vm331 = vcmp.ge.s32.totalorder %v330, 0
          %vm332 = vcmp.lt.s32.totalorder %v330, 512
          %vm333 = vmand %vm331, %vm332
          %334 = vst.msk [vmem:[#allocation2] sm:$0xf] %vm333, 0.0
        $region48: #{tpu_custom_call.1} parent=35 // pred_fallthru
          _
        %v335 = vld [vmem:[%s269] sm:$0xff]
        %v336 = vld [vmem:[%s269 + $0x8] sm:$0xff]
        %v337 = vld [vmem:[%s269 + $0x10] sm:$0xff]
        %v338 = vld [vmem:[%s269 + $0x18] sm:$0xff]
        %v339 = vld [vmem:[%s269 + $0x20] sm:$0xff]
        %v340 = vld [vmem:[%s269 + $0x28] sm:$0xff]
        %v341 = vld [vmem:[%s269 + $0x30] sm:$0xff]
        %v342 = vld [vmem:[%s269 + $0x38] sm:$0xff]
        %v343 = vld [vmem:[%s269 + $0x40] sm:$0xff]
        %v344 = vld [vmem:[%s269 + $0x48] sm:$0xff]
        %v345 = vld [vmem:[%s269 + $0x50] sm:$0xff]
        %v346 = vld [vmem:[%s269 + $0x58] sm:$0xff]
        %v347 = vld [vmem:[%s269 + $0x60] sm:$0xff]
        %v348 = vld [vmem:[%s269 + $0x68] sm:$0xff]
        %v349 = vld [vmem:[%s269 + $0x70] sm:$0xff]
        %v350 = vld [vmem:[%s269 + $0x78] sm:$0xff]
        %v351 = vld [vmem:[%s269 + $0x80] sm:$0xff]
        %v352 = vld [vmem:[%s269 + $0x88] sm:$0xff]
        %v353 = vld [vmem:[%s269 + $0x90] sm:$0xff]
        %v354 = vld [vmem:[%s269 + $0x98] sm:$0xff]
        %v355 = vld [vmem:[%s269 + $0xa0] sm:$0xff]
        %v356 = vld [vmem:[%s269 + $0xa8] sm:$0xff]
        %v357 = vld [vmem:[%s269 + $0xb0] sm:$0xff]
        %v358 = vld [vmem:[%s269 + $0xb8] sm:$0xff]
        %v359 = vld [vmem:[%s278] sm:$0xff]
        %v360 = vld [vmem:[%s278 + $0x8] sm:$0xff]
        %v361 = vld [vmem:[%s278 + $0x10] sm:$0xff]
        %v362 = vld [vmem:[%s278 + $0x18] sm:$0xff]
        %v363 = vld [vmem:[%s278 + $0x20] sm:$0xff]
        %v364 = vld [vmem:[%s278 + $0x28] sm:$0xff]
        %v365 = vld [vmem:[%s278 + $0x30] sm:$0xff]
        %v366 = vld [vmem:[%s278 + $0x38] sm:$0xff]
        %v367 = vld [vmem:[%s278 + $0x40] sm:$0xff]
        %v368 = vld [vmem:[%s278 + $0x48] sm:$0xff]
        %v369 = vld [vmem:[%s278 + $0x50] sm:$0xff]
        %v370 = vld [vmem:[%s278 + $0x58] sm:$0xff]
        %v371 = vld [vmem:[%s278 + $0x60] sm:$0xff]
        %v372 = vld [vmem:[%s278 + $0x68] sm:$0xff]
        %v373 = vld [vmem:[%s278 + $0x70] sm:$0xff]
        %v374 = vld [vmem:[%s278 + $0x78] sm:$0xff]
        %v375 = vld [vmem:[%s2] sm:$0xff]
        %v376 = vld [vmem:[%s2 + $0x8] sm:$0xff]
        %v377 = vld [vmem:[%s2 + $0x10] sm:$0xff]
        %v378 = vld [vmem:[%s2 + $0x18] sm:$0xff]
        %v379 = vld [vmem:[%s3] sm:$0xff]
        %v380 = vld [vmem:[%s3 + $0x8] sm:$0xff]
        %v381 = vld [vmem:[%s3 + $0x10] sm:$0xff]
        %v382 = vld [vmem:[%s3 + $0x18] sm:$0xff]
        %384 = vset.pattern.permute.xlu0 0
        %385 = vperm.xlu0 %384, %v379
        %v386 = vpop.permute.xlu0 %385
        %389 = vset.pattern.permute.xlu0 0
        %390 = vperm.xlu0 %389, %v380
        %v391 = vpop.permute.xlu0 %390
        %394 = vset.pattern.permute.xlu0 0
        %395 = vperm.xlu0 %394, %v381
        %v396 = vpop.permute.xlu0 %395
        %399 = vset.pattern.permute.xlu0 0
        %400 = vperm.xlu0 %399, %v382
        %v401 = vpop.permute.xlu0 %400
        %vm403 = vcmask 392192
        %v405 = vsel %vm403, %v375, 0
        %v408 = vsel %vm403, %v376, 0
        %v411 = vsel %vm403, %v377, 0
        %v414 = vsel %vm403, %v378, 0
        %416 = vmatprep.subr.mxu0 %v336
        %417 = vmatpush1.msra.mxu0 %v335
        %418 = vmatprep.subr.mxu0 %v340
        %419 = vmatpush1.msra.mxu0 %v339
        %420 = vmatprep.subr.mxu0 %v344
        %421 = vmatpush1.msra.mxu0 %v343
        %422 = vmatprep.subr.mxu0 %v348
        %423 = vmatpush1.msra.mxu0 %v347
        %424 = vmatprep.subr.mxu0 %v352
        %425 = vmatpush1.msra.mxu0 %v351
        %426 = vmatprep.subr.mxu0 %v356
        %427 = vmatpush1.msra.mxu0 %v355
        %428 = vmatprep.subr.mxu0 0.0
        %429 = vmatpush1.msra.mxu0 0.0
        %430 = vmatprep.subr.mxu0 0.0
        %431 = vmatpush1.msra.mxu0 0.0
        %432 = vmatprep.subr.mxu0 0.0
        %433 = vmatpush1.msra.mxu0 0.0
        %434 = vmatprep.subr.mxu0 0.0
        %435 = vmatpush1.msra.mxu0 0.0
        %436 = vmatprep.subr.mxu0 0.0
        %437 = vmatpush1.msra.mxu0 0.0
        %438 = vmatprep.subr.mxu0 0.0
        %439 = vmatpush1.msra.mxu0 0.0
        %440 = vmatprep.subr.mxu0 0.0
        %441 = vmatpush1.msra.mxu0 0.0
        %442 = vmatprep.subr.mxu0 0.0
        %443 = vmatpush1.msra.mxu0 0.0
        %444 = vmatprep.subr.mxu0 0.0
        %445 = vmatpush1.msra.mxu0 0.0
        %446 = vmatprep.subr.mxu0 0.0
        %447 = vmatpush1.msra.mxu0 0.0
        %448 = vmatprep.subr.mxu0 0.0
        %449 = vmatpush1.msra.mxu0 0.0
        %450 = vmatprep.subr.mxu0 0.0
        %451 = vmatpush1.msra.mxu0 0.0
        %452 = vmatprep.subr.mxu0 0.0
        %453 = vmatpush1.msra.mxu0 0.0
        %454 = vmatprep.subr.mxu0 0.0
        %455 = vmatpush1.msra.mxu0 0.0
        %456 = vmatprep.subr.mxu0 0.0
        %457 = vmatpush1.msra.mxu0 0.0
        %458 = vmatprep.subr.mxu0 0.0
        %459 = vmatpush1.msra.mxu0 0.0
        %460 = vmatprep.subr.mxu0 0.0
        %461 = vmatpush1.msra.mxu0 0.0
        %462 = vmatprep.subr.mxu0 0.0
        %463 = vmatpush1.msra.mxu0 0.0
        %464 = vmatprep.subr.mxu0 0.0
        %465 = vmatpush1.msra.mxu0 0.0
        %466 = vmatprep.subr.mxu0 0.0
        %467 = vmatpush1.msra.mxu0 0.0
        %468 = vmatprep.subr.mxu0 0.0
        %469 = vmatpush1.msra.mxu0 0.0
        %470 = vmatprep.subr.mxu0 0.0
        %471 = vmatpush1.msra.mxu0 0.0
        %472 = vmatprep.subr.mxu0 0.0
        %473 = vmatpush1.msra.mxu0 0.0
        %474 = vmatprep.subr.mxu0 0.0
        %475 = vmatpush1.msra.mxu0 0.0
        %476 = vmatprep.subr.mxu0 0.0
        %477 = vmatpush1.msra.mxu0 0.0
        %478 = vmatprep.subr.mxu0 0.0
        %479 = vmatpush1.msra.mxu0 0.0
        %480 = vmatprep.mubr.f32.mxu0 0.0
        %481 = vmatmul.mubr.f32.gmra.mrb[0].mxu0 %v405
        %v482 = vpop.f32.mrb[0].mxu0
        %v483 = vadd.f32 %v386, %v482
        %v484 = vpop.f32.mrb[0].mxu0
        %v485 = vadd.f32 %v386, %v484
        %486 = vmatprep.mubr.f32.mxu0 0.0
        %487 = vmatmul.mubr.f32.gmra.mrb[0].mxu0 %v408
        %v488 = vpop.f32.mrb[0].mxu0
        %v489 = vadd.f32 %v391, %v488
        %v490 = vpop.f32.mrb[0].mxu0
        %v491 = vadd.f32 %v391, %v490
        %492 = vmatprep.mubr.f32.mxu0 0.0
        %493 = vmatmul.mubr.f32.gmra.mrb[0].mxu0 %v411
        %v494 = vpop.f32.mrb[0].mxu0
        %v495 = vadd.f32 %v396, %v494
        %v496 = vpop.f32.mrb[0].mxu0
        %v497 = vadd.f32 %v396, %v496
        %498 = vmatprep.mubr.f32.mxu0 0.0
        %499 = vmatmul.mubr.f32.gmra.mrb[0].mxu0 %v414
        %v500 = vpop.f32.mrb[0].mxu0
        %v501 = vadd.f32 %v401, %v500
        %v502 = vpop.f32.mrb[0].mxu0
        %v503 = vadd.f32 %v401, %v502
        %504 = vdwg.mxu0
        %505 = vmatprep.subr.mxu0 %v338
        %506 = vmatpush1.msra.mxu0 %v337
        %507 = vmatprep.subr.mxu0 %v342
        %508 = vmatpush1.msra.mxu0 %v341
        %509 = vmatprep.subr.mxu0 %v346
        %510 = vmatpush1.msra.mxu0 %v345
        %511 = vmatprep.subr.mxu0 %v350
        %512 = vmatpush1.msra.mxu0 %v349
        %513 = vmatprep.subr.mxu0 %v354
        %514 = vmatpush1.msra.mxu0 %v353
        %515 = vmatprep.subr.mxu0 %v358
        %516 = vmatpush1.msra.mxu0 %v357
        %517 = vmatprep.subr.mxu0 0.0
        %518 = vmatpush1.msra.mxu0 0.0
        %519 = vmatprep.subr.mxu0 0.0
        %520 = vmatpush1.msra.mxu0 0.0
        %521 = vmatprep.subr.mxu0 0.0
        %522 = vmatpush1.msra.mxu0 0.0
        %523 = vmatprep.subr.mxu0 0.0
        %524 = vmatpush1.msra.mxu0 0.0
        %525 = vmatprep.subr.mxu0 0.0
        %526 = vmatpush1.msra.mxu0 0.0
        %527 = vmatprep.subr.mxu0 0.0
        %528 = vmatpush1.msra.mxu0 0.0
        %529 = vmatprep.subr.mxu0 0.0
        %530 = vmatpush1.msra.mxu0 0.0
        %531 = vmatprep.subr.mxu0 0.0
        %532 = vmatpush1.msra.mxu0 0.0
        %533 = vmatprep.subr.mxu0 0.0
        %534 = vmatpush1.msra.mxu0 0.0
        %535 = vmatprep.subr.mxu0 0.0
        %536 = vmatpush1.msra.mxu0 0.0
        %537 = vmatprep.subr.mxu0 0.0
        %538 = vmatpush1.msra.mxu0 0.0
        %539 = vmatprep.subr.mxu0 0.0
        %540 = vmatpush1.msra.mxu0 0.0
        %541 = vmatprep.subr.mxu0 0.0
        %542 = vmatpush1.msra.mxu0 0.0
        %543 = vmatprep.subr.mxu0 0.0
        %544 = vmatpush1.msra.mxu0 0.0
        %545 = vmatprep.subr.mxu0 0.0
        %546 = vmatpush1.msra.mxu0 0.0
        %547 = vmatprep.subr.mxu0 0.0
        %548 = vmatpush1.msra.mxu0 0.0
        %549 = vmatprep.subr.mxu0 0.0
        %550 = vmatpush1.msra.mxu0 0.0
        %551 = vmatprep.subr.mxu0 0.0
        %552 = vmatpush1.msra.mxu0 0.0
        %553 = vmatprep.subr.mxu0 0.0
        %554 = vmatpush1.msra.mxu0 0.0
        %555 = vmatprep.subr.mxu0 0.0
        %556 = vmatpush1.msra.mxu0 0.0
        %557 = vmatprep.subr.mxu0 0.0
        %558 = vmatpush1.msra.mxu0 0.0
        %559 = vmatprep.subr.mxu0 0.0
        %560 = vmatpush1.msra.mxu0 0.0
        %561 = vmatprep.subr.mxu0 0.0
        %562 = vmatpush1.msra.mxu0 0.0
        %563 = vmatprep.subr.mxu0 0.0
        %564 = vmatpush1.msra.mxu0 0.0
        %565 = vmatprep.subr.mxu0 0.0
        %566 = vmatpush1.msra.mxu0 0.0
        %567 = vmatprep.subr.mxu0 0.0
        %568 = vmatpush1.msra.mxu0 0.0
        %569 = vmatprep.mubr.f32.mxu0 0.0
        %570 = vmatmul.mubr.f32.gmra.mrb[0].mxu0 %v405
        %v571 = vpop.f32.mrb[0].mxu0
        %v572 = vadd.f32 %v386, %v571
        %v573 = vpop.f32.mrb[0].mxu0
        %v574 = vadd.f32 %v386, %v573
        %575 = vmatprep.mubr.f32.mxu0 0.0
        %576 = vmatmul.mubr.f32.gmra.mrb[0].mxu0 %v408
        %v577 = vpop.f32.mrb[0].mxu0
        %v578 = vadd.f32 %v391, %v577
        %v579 = vpop.f32.mrb[0].mxu0
        %v580 = vadd.f32 %v391, %v579
        %581 = vmatprep.mubr.f32.mxu0 0.0
        %582 = vmatmul.mubr.f32.gmra.mrb[0].mxu0 %v411
        %v583 = vpop.f32.mrb[0].mxu0
        %v584 = vadd.f32 %v396, %v583
        %v585 = vpop.f32.mrb[0].mxu0
        %v586 = vadd.f32 %v396, %v585
        %587 = vmatprep.mubr.f32.mxu0 0.0
        %588 = vmatmul.mubr.f32.gmra.mrb[0].mxu0 %v414
        %v589 = vpop.f32.mrb[0].mxu0
        %v590 = vadd.f32 %v401, %v589
        %v591 = vpop.f32.mrb[0].mxu0
        %v592 = vadd.f32 %v401, %v591
        %593 = vdwg.mxu0
        %v594 = vmul.f32 %v483, %v483
        %v595 = vmul.f32 %v485, %v485
        %v596 = vmul.f32 %v572, %v572
        %v597 = vmul.f32 %v574, %v574
        %v598 = vmul.f32 %v489, %v489
        %v599 = vmul.f32 %v491, %v491
        %v600 = vmul.f32 %v578, %v578
        %v601 = vmul.f32 %v580, %v580
        %v602 = vmul.f32 %v495, %v495
        %v603 = vmul.f32 %v497, %v497
        %v604 = vmul.f32 %v584, %v584
        %v605 = vmul.f32 %v586, %v586
        %v606 = vmul.f32 %v501, %v501
        %v607 = vmul.f32 %v503, %v503
        %v608 = vmul.f32 %v590, %v590
        %v609 = vmul.f32 %v592, %v592
        %v610 = vadd.f32 %v594, %v598
        %v611 = vadd.f32 %v610, %v602
        %v612 = vadd.f32 %v611, %v606
        %v613 = vrot.slane %v612, 4
        %v614 = vadd.f32 %v612, %v613
        %v615 = vrot.slane %v614, 2
        %v616 = vadd.f32 %v614, %v615
        %v617 = vrot.slane %v616, 1
        %v618 = vadd.f32 %v616, %v617
        %v619 = vadd.f32 %v595, %v599
        %v620 = vadd.f32 %v619, %v603
        %v621 = vadd.f32 %v620, %v607
        %v622 = vrot.slane %v621, 4
        %v623 = vadd.f32 %v621, %v622
        %v624 = vrot.slane %v623, 2
        %v625 = vadd.f32 %v623, %v624
        %v626 = vrot.slane %v625, 1
        %v627 = vadd.f32 %v625, %v626
        %v628 = vadd.f32 %v596, %v600
        %v629 = vadd.f32 %v628, %v604
        %v630 = vadd.f32 %v629, %v608
        %v631 = vrot.slane %v630, 4
        %v632 = vadd.f32 %v630, %v631
        %v633 = vrot.slane %v632, 2
        %v634 = vadd.f32 %v632, %v633
        %v635 = vrot.slane %v634, 1
        %v636 = vadd.f32 %v634, %v635
        %v637 = vadd.f32 %v597, %v601
        %v638 = vadd.f32 %v637, %v605
        %v639 = vadd.f32 %v638, %v609
        %v640 = vrot.slane %v639, 4
        %v641 = vadd.f32 %v639, %v640
        %v642 = vrot.slane %v641, 2
        %v643 = vadd.f32 %v641, %v642
        %v644 = vrot.slane %v643, 1
        %v645 = vadd.f32 %v643, %v644
        %v646 = vmul.f32 %v359, %v359
        %v647 = vmul.f32 %v360, %v360
        %v648 = vmul.f32 %v361, %v361
        %v649 = vmul.f32 %v362, %v362
        %v650 = vmul.f32 %v363, %v363
        %v651 = vmul.f32 %v364, %v364
        %v652 = vmul.f32 %v365, %v365
        %v653 = vmul.f32 %v366, %v366
        %v654 = vmul.f32 %v367, %v367
        %v655 = vmul.f32 %v368, %v368
        %v656 = vmul.f32 %v369, %v369
        %v657 = vmul.f32 %v370, %v370
        %v658 = vmul.f32 %v371, %v371
        %v659 = vmul.f32 %v372, %v372
        %v660 = vmul.f32 %v373, %v373
        %v661 = vmul.f32 %v374, %v374
        %v662 = vadd.f32 %v646, %v650
        %v663 = vadd.f32 %v662, %v654
        %v664 = vadd.f32 %v663, %v658
        %v665 = vrot.slane %v664, 4
        %v666 = vadd.f32 %v664, %v665
        %v667 = vrot.slane %v666, 2
        %v668 = vadd.f32 %v666, %v667
        %v669 = vrot.slane %v668, 1
        %v670 = vadd.f32 %v668, %v669
        %v671 = vadd.f32 %v647, %v651
        %v672 = vadd.f32 %v671, %v655
        %v673 = vadd.f32 %v672, %v659
        %v674 = vrot.slane %v673, 4
        %v675 = vadd.f32 %v673, %v674
        %v676 = vrot.slane %v675, 2
        %v677 = vadd.f32 %v675, %v676
        %v678 = vrot.slane %v677, 1
        %v679 = vadd.f32 %v677, %v678
        %v680 = vadd.f32 %v648, %v652
        %v681 = vadd.f32 %v680, %v656
        %v682 = vadd.f32 %v681, %v660
        %v683 = vrot.slane %v682, 4
        %v684 = vadd.f32 %v682, %v683
        %v685 = vrot.slane %v684, 2
        %v686 = vadd.f32 %v684, %v685
        %v687 = vrot.slane %v686, 1
        %v688 = vadd.f32 %v686, %v687
        %v689 = vadd.f32 %v649, %v653
        %v690 = vadd.f32 %v689, %v657
        %v691 = vadd.f32 %v690, %v661
        %v692 = vrot.slane %v691, 4
        %v693 = vadd.f32 %v691, %v692
        %v694 = vrot.slane %v693, 2
        %v695 = vadd.f32 %v693, %v694
        %v696 = vrot.slane %v695, 1
        %v697 = vadd.f32 %v695, %v696
        %v698 = vmul.f32 %v483, %v359
        %v699 = vmul.f32 %v485, %v360
        %v700 = vmul.f32 %v572, %v361
        %v701 = vmul.f32 %v574, %v362
        %v702 = vmul.f32 %v489, %v363
        %v703 = vmul.f32 %v491, %v364
        %v704 = vmul.f32 %v578, %v365
        %v705 = vmul.f32 %v580, %v366
        %v706 = vmul.f32 %v495, %v367
        %v707 = vmul.f32 %v497, %v368
        %v708 = vmul.f32 %v584, %v369
        %v709 = vmul.f32 %v586, %v370
        %v710 = vmul.f32 %v501, %v371
        %v711 = vmul.f32 %v503, %v372
        %v712 = vmul.f32 %v590, %v373
        %v713 = vmul.f32 %v592, %v374
        %v714 = vadd.f32 %v698, %v702
        %v715 = vadd.f32 %v714, %v706
        %v716 = vadd.f32 %v715, %v710
        %v717 = vrot.slane %v716, 4
        %v718 = vadd.f32 %v716, %v717
        %v719 = vrot.slane %v718, 2
        %v720 = vadd.f32 %v718, %v719
        %v721 = vrot.slane %v720, 1
        %v722 = vadd.f32 %v720, %v721
        %v723 = vadd.f32 %v699, %v703
        %v724 = vadd.f32 %v723, %v707
        %v725 = vadd.f32 %v724, %v711
        %v726 = vrot.slane %v725, 4
        %v727 = vadd.f32 %v725, %v726
        %v728 = vrot.slane %v727, 2
        %v729 = vadd.f32 %v727, %v728
        %v730 = vrot.slane %v729, 1
        %v731 = vadd.f32 %v729, %v730
        %v732 = vadd.f32 %v700, %v704
        %v733 = vadd.f32 %v732, %v708
        %v734 = vadd.f32 %v733, %v712
        %v735 = vrot.slane %v734, 4
        %v736 = vadd.f32 %v734, %v735
        %v737 = vrot.slane %v736, 2
        %v738 = vadd.f32 %v736, %v737
        %v739 = vrot.slane %v738, 1
        %v740 = vadd.f32 %v738, %v739
        %v741 = vadd.f32 %v701, %v705
        %v742 = vadd.f32 %v741, %v709
        %v743 = vadd.f32 %v742, %v713
        %v744 = vrot.slane %v743, 4
        %v745 = vadd.f32 %v743, %v744
        %v746 = vrot.slane %v745, 2
        %v747 = vadd.f32 %v745, %v746
        %v748 = vrot.slane %v747, 1
        %v749 = vadd.f32 %v747, %v748
        %v750 = vrsqrt.pop %v618
        %v751 = vmul.f32 %v618, %v750
        %vm752 = vcmp.eq.f32.partialorder %v618, inf
        %v753 = vsel %vm752, %v618, %v751
        %vm754 = vcmp.eq.f32.partialorder %v618, 0.0
        %v755 = vand.u32 %v618, 2147483648
        %v756 = vsel %vm754, %v755, %v753
        %v757 = vrsqrt.pop %v627
        %v758 = vmul.f32 %v627, %v757
        %vm759 = vcmp.eq.f32.partialorder %v627, inf
        %v760 = vsel %vm759, %v627, %v758
        %vm761 = vcmp.eq.f32.partialorder %v627, 0.0
        %v762 = vand.u32 %v627, 2147483648
        %v763 = vsel %vm761, %v762, %v760
        %v764 = vrsqrt.pop %v636
        %v765 = vmul.f32 %v636, %v764
        %vm766 = vcmp.eq.f32.partialorder %v636, inf
        %v767 = vsel %vm766, %v636, %v765
        %vm768 = vcmp.eq.f32.partialorder %v636, 0.0
        %v769 = vand.u32 %v636, 2147483648
        %v770 = vsel %vm768, %v769, %v767
        %v771 = vrsqrt.pop %v645
        %v772 = vmul.f32 %v645, %v771
        %vm773 = vcmp.eq.f32.partialorder %v645, inf
        %v774 = vsel %vm773, %v645, %v772
        %vm775 = vcmp.eq.f32.partialorder %v645, 0.0
        %v776 = vand.u32 %v645, 2147483648
        %v777 = vsel %vm775, %v776, %v774
        %v778 = vmax.f32 %v756, 1e-12
        %v779 = vmax.f32 %v763, 1e-12
        %v780 = vmax.f32 %v770, 1e-12
        %v781 = vmax.f32 %v777, 1e-12
        %v782 = vrsqrt.pop %v670
        %v783 = vmul.f32 %v670, %v782
        %vm784 = vcmp.eq.f32.partialorder %v670, inf
        %v785 = vsel %vm784, %v670, %v783
        %vm786 = vcmp.eq.f32.partialorder %v670, 0.0
        %v787 = vand.u32 %v670, 2147483648
        %v788 = vsel %vm786, %v787, %v785
        %v789 = vrsqrt.pop %v679
        %v790 = vmul.f32 %v679, %v789
        %vm791 = vcmp.eq.f32.partialorder %v679, inf
        %v792 = vsel %vm791, %v679, %v790
        %vm793 = vcmp.eq.f32.partialorder %v679, 0.0
        %v794 = vand.u32 %v679, 2147483648
        %v795 = vsel %vm793, %v794, %v792
        %v796 = vrsqrt.pop %v688
        %v797 = vmul.f32 %v688, %v796
        %vm798 = vcmp.eq.f32.partialorder %v688, inf
        %v799 = vsel %vm798, %v688, %v797
        %vm800 = vcmp.eq.f32.partialorder %v688, 0.0
        %v801 = vand.u32 %v688, 2147483648
        %v802 = vsel %vm800, %v801, %v799
        %v803 = vrsqrt.pop %v697
        %v804 = vmul.f32 %v697, %v803
        %vm805 = vcmp.eq.f32.partialorder %v697, inf
        %v806 = vsel %vm805, %v697, %v804
        %vm807 = vcmp.eq.f32.partialorder %v697, 0.0
        %v808 = vand.u32 %v697, 2147483648
        %v809 = vsel %vm807, %v808, %v806
        %v810 = vmax.f32 %v788, 1e-12
        %v811 = vmax.f32 %v795, 1e-12
        %v812 = vmax.f32 %v802, 1e-12
        %v813 = vmax.f32 %v809, 1e-12
        %v814 = vmul.f32 %v778, %v810
        %v815 = vmul.f32 %v779, %v811
        %v816 = vmul.f32 %v780, %v812
        %v817 = vmul.f32 %v781, %v813
        %v818 = vrcp.pop %v814
        %v819 = vmul.f32 1.0, %v818
        %v820 = vrcp.pop %v815
        %v821 = vmul.f32 1.0, %v820
        %v822 = vrcp.pop %v816
        %v823 = vmul.f32 1.0, %v822
        %v824 = vrcp.pop %v817
        %v825 = vmul.f32 1.0, %v824
        %v826 = vmul.f32 %v722, %v819
        %v827 = vmul.f32 %v731, %v821
        %v828 = vmul.f32 %v740, %v823
        %v829 = vmul.f32 %v749, %v825
        %v830 = vmul.f32 %v618, %v670
        %v831 = vmul.f32 %v627, %v679
        %v832 = vmul.f32 %v636, %v688
        %v833 = vmul.f32 %v645, %v697
        %v834 = vmul.f32 %v819, %v819
        %v835 = vmul.f32 %v821, %v821
        %v836 = vmul.f32 %v823, %v823
        %v837 = vmul.f32 %v825, %v825
        %v838 = vmul.f32 %v830, %v834
        %v839 = vmul.f32 %v831, %v835
        %v840 = vmul.f32 %v832, %v836
        %v841 = vmul.f32 %v833, %v837
        %v842 = vmax.f32 %v838, 1e-16
        %v843 = vmax.f32 %v839, 1e-16
        %v844 = vmax.f32 %v840, 1e-16
        %v845 = vmax.f32 %v841, 1e-16
        %v846 = vrsqrt.pop %v842
        %v847 = vrsqrt.pop %v843
        %v848 = vrsqrt.pop %v844
        %v849 = vrsqrt.pop %v845
        %v850 = vmul.f32 %v826, %v846
        %v851 = vmul.f32 %v827, %v847
        %v852 = vmul.f32 %v828, %v848
        %v853 = vmul.f32 %v829, %v849
        %v854 = vsub.f32 1.0, %v850
        %v855 = vsub.f32 1.0, %v851
        %v856 = vsub.f32 1.0, %v852
        %v857 = vsub.f32 1.0, %v853
        %s858 = smul.u32 %s27, 2
        %s859 = sadd.s32 %s858, %s28
        %s860 = smul.u32 %s859, 512
        %v861 = vlaneseq
        %v862 = vand.u32 %v861, 127
        %v863 = vadd.s32 %v862, 128
        %v864 = vadd.s32 %v862, 256
        %v865 = vadd.s32 %v862, 384
        %v866 = vstv %s860
        %v867 = vadd.s32 %v866, %v862
        %v868 = vadd.s32 %v866, %v863
        %v869 = vadd.s32 %v866, %v864
        %v870 = vadd.s32 %v866, %v865
        %vm871 = vcmp.lt.s32.totalorder %v867, 576
        %vm872 = vcmp.lt.s32.totalorder %v868, 576
        %vm873 = vcmp.lt.s32.totalorder %v869, 576
        %vm874 = vcmp.lt.s32.totalorder %v870, 576
        %v875 = vsel %vm871, %v854, 0.0
        %v876 = vsel %vm872, %v855, 0.0
        %v877 = vsel %vm873, %v856, 0.0
        %v878 = vsel %vm874, %v857, 0.0
        %v879 = vld [vmem:[#allocation2] sm:$0xf]
        %v884 = vcombine.low %v875, %v876
        %v885 = vcombine.low %v877, %v878
        %v887 = vunpack.c.l.s4 1966171168
        %v888 = vunpack.c.0.s8 %v887
        %v889 = vlaneseq
        %v890 = vshrl.u32 %v889, 7
        %v891 = vsub.s32 %v888, %v890
        %v892 = vrot.slane %v884, %v891
        %v894 = vunpack.c.l.s4 1966171168
        %v895 = vunpack.c.0.s8 %v894
        %v896 = vlaneseq
        %v897 = vshrl.u32 %v896, 7
        %v898 = vsub.s32 %v895, %v897
        %v899 = vrot.slane %v885, %v898
        %v900 = vcombine.low %v892, %v899
        %v902 = vunpack.c.l.s4 1966171168
        %v903 = vunpack.c.0.s8 %v902
        %v904 = vlaneseq
        %v905 = vshrl.u32 %v904, 7
        %v906 = vsub.s32 %v903, %v905
        %v907 = vrot.slane %v900, %v906
        %v909 = vadd.f32 %v879, %v907
        %v910 = vlaneseq
        %vm911 = vcmp.ge.s32.totalorder %v910, 0
        %vm912 = vcmp.lt.s32.totalorder %v910, 512
        %vm913 = vmand %vm911, %vm912
        %914 = vst.msk [vmem:[#allocation2] sm:$0xf] %vm913, %v909
        %p915 = scmp.eq.s32.totalorder %s28, 1
        // Predicated region
        $region49: #{tpu_custom_call.1} parent=35 // pred_check
          %p916 = pneg %p915
        $region50: #{tpu_custom_call.1} parent=35 // pred_check_branch
          %918 = sbr.rel (%p916) target = $region52
        $region51: #{tpu_custom_call.1} parent=35 // pred_region
          %v919 = vld [vmem:[#allocation2] sm:$0xf]
          %v921 = vlaneseq
          %v922 = vshrl.u32 %v921, 7
          %v923 = vsub.s32 0, %v922
          %v924 = vrot.slane %v919, %v923
          %v925 = vlaneseq
          %v926 = vshrl.u32 %v925, 7
          %v927 = vsub.s32 1, %v926
          %v928 = vrot.slane %v919, %v927
          %v929 = vlaneseq
          %v930 = vshrl.u32 %v929, 7
          %v931 = vsub.s32 2, %v930
          %v932 = vrot.slane %v919, %v931
          %v933 = vlaneseq
          %v934 = vshrl.u32 %v933, 7
          %v935 = vsub.s32 3, %v934
          %v936 = vrot.slane %v919, %v935
          %vm941 = vcmask 1040384
          %v942 = vsel %vm941, %v924, 0.0
          %v943 = vsel %vm941, %v928, 0.0
          %v944 = vadd.f32 %v942, %v943
          %v945 = vsel %vm941, %v932, 0.0
          %v946 = vadd.f32 %v944, %v945
          %v947 = vsel %vm941, %v936, 0.0
          %v948 = vadd.f32 %v946, %v947
          %949 = vadd.xlane.f32.xlu0 %v948
          %v950 = vpop.xlane.xlu0 %949
          %v951 = vrot.slane %v950, 4
          %v952 = vadd.f32 %v950, %v951
          %v953 = vrot.slane %v952, 2
          %v954 = vadd.f32 %v952, %v953
          %v955 = vrot.slane %v954, 1
          %v956 = vadd.f32 %v954, %v955
          %s957 = vtos %v956
          %v958 = vstv %s957
          %vm959 = vcmask 0
          %960 = vst.msk [vmem:[%s324] sm:$0x1] %vm959, %v958
        $region52: #{tpu_custom_call.1} parent=35 // pred_fallthru
          _
        %s961 = sadd.s32 %s26, %s27
        %p962 = scmp.lt.s32.totalorder %s961, 1
        %s963 = scalar_select %p962, %s961, 1
        %s964 = scalar_lea.vmem %s4, %s963
        // Predicated region
        $region53: #{tpu_custom_call.1} parent=35 // pred_check
          %p965 = pneg %p166
        $region54: #{tpu_custom_call.1} parent=35 // pred_check_branch
          %967 = sbr.rel (%p965) target = $region56
        $region55: #{tpu_custom_call.1} parent=35 // pred_region
          %s968 = sadd.s32 %s26, %s27
        $region56: #{tpu_custom_call.1} parent=35 // pred_fallthru
          _
      $region36: #{tpu_custom_call.1} parent=5 // pred_fallthru
        _
      %p969 = scmp.le.s32.totalorder 2, %s16
      // Predicated region
      $region57: #{tpu_custom_call.1} parent=5 // pred_check
        %p970 = pneg %p969
      $region58: #{tpu_custom_call.1} parent=5 // pred_check_branch
        %972 = sbr.rel (%p970) target = $region60
      $region59: #{tpu_custom_call.1} parent=5 // pred_region
        %s973 = ssub.s32 %s16, 2
        // Predicated region
        $region61: #{tpu_custom_call.1} parent=59 // pred_check
          %p974 = pneg %p172
        $region62: #{tpu_custom_call.1} parent=59 // pred_check_branch
          %976 = sbr.rel (%p974) target = $region64
        $region63: #{tpu_custom_call.1} parent=59 // pred_region
          %s977 = sadd.s32 %s29, %s30
          %p978 = scmp.lt.s32.totalorder %s977, 1
          %s979 = scalar_select %p978, %s977, 1
          %s980 = scalar_lea.vmem %s4, %s979
        $region64: #{tpu_custom_call.1} parent=59 // pred_fallthru
          _
      $region60: #{tpu_custom_call.1} parent=5 // pred_fallthru
        _
    $region6: #{tpu_custom_call.1} parent=1 // loop_footer
      %s20 = sadd.s32 1, %s16
    $region7: #{tpu_custom_call.1} parent=1 // loop_footer_branch
      %15 = sbr.rel target = $region3
    $region8: #{tpu_custom_call.1} parent=1 // loop_exit
      _
    %981 = vsyncpa [#allocation4], 1
    %s982 = scalar_lea.sflag [#allocation4], 1
    %983 = vsyncpa %s982, 1
    %984 = vsyncpa [#allocation6], 1
    %s985 = scalar_lea.sflag [#allocation6], 1
    %986 = vsyncpa %s985, 1

</llo_original>
